<compile_context>
chip_gen: v5e
topology: v5e:2x2
jax: 0.10.0
libtpu: 0.0.40
codegen_flags: <defaults>
</compile_context>

<pallas_src>
import functools

import jax
import jax.numpy as jnp
import numpy as np
from jax.experimental import pallas as pl
from jax.experimental.pallas import tpu as pltpu


def _attn_kernel(s_ref, prev_ref, wprev_ref, ws_ref, bs_ref, v_ref, ct_ref):
    # s_ref    : (TB, H)     current hidden states for this batch tile
    # prev_ref : (TB, T, H)  previous decoder hidden states for this batch tile
    # wprev_ref: (H, H)      W_prev  (stored (in, out); y = x @ W)
    # ws_ref   : (H, H)      W_s     (stored (in, out))
    # bs_ref   : (1, H)      bias of W_s
    # v_ref    : (1, H)      v       (scoring vector of Linear(H, 1))
    # ct_ref   : (TB, H)     output context vectors
    prev = prev_ref[...]                                           # (TB, T, H)

    # et = W_prev(prev_s): single MXU contraction on the 3-D block, no reshape
    # (avoids relayout copies when T % 8 != 0).
    et = jax.lax.dot_general(
        prev, wprev_ref[...],
        dimension_numbers=(((2,), (0,)), ((), ())),
        preferred_element_type=jnp.float32)                        # (TB, T, H)

    # dec_fea = W_s(s_t) + b: one (TB, H) @ (H, H) MXU matmul.
    dec = jnp.dot(s_ref[...], ws_ref[...],
                  preferred_element_type=jnp.float32) + bs_ref[...]    # (TB, H)

    # TODO(synk): on v6e/v7x (bf16 VPU/EUP) the tanh/score path can run in
    # bfloat16 for ~2x elementwise throughput; kept in f32 here for exact
    # parity with the f32 reference (v5e has no bf16 VPU/EUP anyway).
    et = jnp.tanh(et + dec[:, None, :])                            # (TB, T, H)

    # scores = v(et).squeeze(-1): lane reduction over H.
    scores = jnp.sum(et * v_ref[...], axis=-1)                     # (TB, T)

    # at = softmax(scores, over T); denominator via EUP approx reciprocal.
    m = jnp.max(scores, axis=1, keepdims=True)                     # (TB, 1)
    p = jnp.exp(scores - m)                                        # (TB, T)
    at = p * pl.reciprocal(jnp.sum(p, axis=1, keepdims=True), approx=True)

    # ct_d = sum_t at[:, t] * prev[:, t, :]: f32 VPU weighted sum over T
    # (replaces TB separate 1-row MXU matvecs; keeps `at` in f32).
    ct = jnp.sum(at[:, :, None] * prev.astype(jnp.float32), axis=1)    # (TB, H)
    # TODO(synk): for H < 128 this is a masked partial store; a lane-dense
    # (TB/k, k*H) output packing would remove it (H >= 128 is already dense).
    ct_ref[...] = ct.astype(ct_ref.dtype)


def _vmem_capacity_bytes():
    """Per-core VMEM capacity (generation aware), with safe fallbacks."""
    try:
        cap = getattr(pltpu.get_tpu_info(), "vmem_capacity_bytes", None)
        if cap:
            return int(cap)
    except Exception:
        pass
    try:
        kind = jax.devices()[0].device_kind.lower()
    except Exception:
        kind = ""
    return (64 << 20) if "v7" in kind else (128 << 20)


def _choose_tile(B, T, H, itemsize):
    """Largest batch tile TB (divisor of B, multiple of 8 or == B) whose
    double-buffered working set fits the generation-aware VMEM budget,
    preferring >= 2 grid steps.  Returns (TB, vmem_limit_bytes)."""
    capacity = _vmem_capacity_bytes()
    usable = int(0.6 * capacity)
    weights = 2 * H * H * itemsize            # W_prev + W_s (constant index_map, resident)
    small = 2 * H * itemsize                  # b_s + v
    per_row = (T + 2) * H * itemsize          # prev_s + s_t + ct bytes per batch row
    avail = usable - weights - small
    tb_max = max(avail // (2 * per_row), 1)   # x2: double-buffered pipeline

    divisors = [d for d in range(1, B + 1) if B % d == 0]
    aligned = [d for d in divisors if d % 8 == 0 or d == B]
    cands = aligned if aligned else divisors
    fits = [d for d in cands if d <= tb_max]
    if fits:
        multi = [d for d in fits if B // d >= 2]   # keep both v7x TCs busy
        tb = max(multi) if multi else max(fits)
    else:
        tb = min(cands)

    need = 2 * tb * per_row + weights + small
    vmem_limit = int(min(0.9 * capacity, max(need + (8 << 20), 32 << 20)))
    return tb, vmem_limit


@functools.partial(jax.jit, static_argnames=("intra_decoder",))
def decoder_attention_forward(s_t, prev_s, W_prev, W_s, b_s, v, *, intra_decoder=True):
    """Mirrors decoder_attention.forward.

    s_t    : (B, H)
    prev_s : (B, T, H) or None
    Returns (ct_d (B, H), prev_s_new)
    """
    B, H = s_t.shape

    if not intra_decoder:
        return jnp.zeros_like(s_t), prev_s

    if prev_s is None:
        return jnp.zeros_like(s_t), s_t[:, None, :]

    T = prev_s.shape[1]
    itemsize = jnp.dtype(s_t.dtype).itemsize

    # Pad batch to a multiple of 8 so the (TB, H) block specs are sublane
    # aligned for any B (padded rows are computed and discarded).
    pad = (-B) % 8
    if pad:
        s_t_p = jnp.pad(s_t, ((0, pad), (0, 0)))
        prev_p = jnp.pad(prev_s, ((0, pad), (0, 0), (0, 0)))
    else:
        s_t_p, prev_p = s_t, prev_s
    Bp = B + pad

    TB, vmem_limit = _choose_tile(Bp, T, H, itemsize)

    ct_p = pl.pallas_call(
        _attn_kernel,
        out_shape=jax.ShapeDtypeStruct((Bp, H), s_t.dtype),
        grid=(Bp // TB,),
        in_specs=[
            pl.BlockSpec((TB, H), lambda b: (b, 0)),          # s_t
            # NOTE: if profiling shows exposed DMA on prev_s, add
            # pipeline_mode=pl.Buffered(3) here (costs one extra VMEM block).
            pl.BlockSpec((TB, T, H), lambda b: (b, 0, 0)),    # prev_s
            pl.BlockSpec((H, H), lambda b: (0, 0)),           # W_prev
            pl.BlockSpec((H, H), lambda b: (0, 0)),           # W_s
            pl.BlockSpec((1, H), lambda b: (0, 0)),           # b_s
            pl.BlockSpec((1, H), lambda b: (0, 0)),           # v
        ],
        out_specs=pl.BlockSpec((TB, H), lambda b: (b, 0)),
        compiler_params=pltpu.CompilerParams(
            dimension_semantics=("parallel",),
            vmem_limit_bytes=vmem_limit),
    )(s_t_p, prev_p, W_prev, W_s, b_s, v)

    ct_d = ct_p[:B] if pad else ct_p

    # TODO(synk): in a real decode loop, replace this O(B*T*H) HBM copy per
    # step (O(T^2) over a decode) with a preallocated (B, T_max, H) cache
    # updated in place (lax.dynamic_update_slice with donation, or a Pallas
    # writeback kernel using input_output_aliases) plus a scalar-prefetched
    # valid length.  Kept to match the module's exact forward semantics.
    prev_s_new = jnp.concatenate([prev_s, s_t[:, None, :]], axis=1)
    return ct_d, prev_s_new


def _reference(s_t, prev_s, W_prev, W_s, b_s, v):
    et = jnp.einsum("bth,hk->btk", prev_s, W_prev)
    dec = (s_t @ W_s + b_s[0])[:, None, :]
    et = jnp.tanh(et + dec)
    scores = jnp.einsum("bth,h->bt", et, v[0])
    at = jax.nn.softmax(scores, axis=1)
    ct = jnp.einsum("bt,bth->bh", at, prev_s)
    return ct


if __name__ == "__main__":
    # Small shapes consistent with the module's forward; B=16 gives a TB=8
    # batch tile and a 2-step "parallel" grid (exercises both v7x TCs).
    B, T, H = 16, 8, 32

    key = jax.random.PRNGKey(0)
    k1, k2, k3, k4, k5, k6 = jax.random.split(key, 6)

    # Deterministic parameter init (shapes from nn.Linear(H, H) / nn.Linear(H, 1)).
    # Weights stored as (in, out); equivalent to PyTorch's x @ W.T with W (out, in).
    W_prev = jax.random.normal(k1, (H, H), jnp.float32) * 0.1
    W_s = jax.random.normal(k2, (H, H), jnp.float32) * 0.1
    b_s = jax.random.normal(k3, (1, H), jnp.float32) * 0.1
    v = jax.random.normal(k4, (1, H), jnp.float32) * 0.1

    s_t = jax.random.normal(k5, (B, H), jnp.float32)
    prev_s = jax.random.normal(k6, (B, T, H), jnp.float32)

    ct_d, prev_s_new = decoder_attention_forward(
        s_t, prev_s, W_prev, W_s, b_s, v, intra_decoder=True)
    jax.block_until_ready((ct_d, prev_s_new))

    # Sanity check against a pure-JAX reference.  The approximate EUP
    # reciprocal in the softmax denominator trades a tiny bit of precision,
    # hence the slightly relaxed tolerance.
    ref_ct = _reference(s_t, prev_s, W_prev, W_s, b_s, v)
    assert ct_d.shape == (B, H)
    assert prev_s_new.shape == (B, T + 1, H)
    np.testing.assert_allclose(np.asarray(ct_d), np.asarray(ref_ct),
                               rtol=2e-3, atol=2e-3)
    np.testing.assert_allclose(
        np.asarray(prev_s_new),
        np.concatenate([np.asarray(prev_s), np.asarray(s_t)[:, None, :]], axis=1),
        rtol=0, atol=0)

    # Odd batch (exercises the 8-row padding path): B=3.
    s_t3 = s_t[:3]
    prev_s3 = prev_s[:3]
    ct3, prev3 = decoder_attention_forward(
        s_t3, prev_s3, W_prev, W_s, b_s, v, intra_decoder=True)
    jax.block_until_ready((ct3, prev3))
    np.testing.assert_allclose(
        np.asarray(ct3), np.asarray(_reference(s_t3, prev_s3, W_prev, W_s, b_s, v)),
        rtol=2e-3, atol=2e-3)

    # prev_s is None path (first decode step): zeros context + seeded cache.
    ct0, prev0 = decoder_attention_forward(
        s_t, None, W_prev, W_s, b_s, v, intra_decoder=True)
    jax.block_until_ready((ct0, prev0))
    assert prev0.shape == (B, 1, H)
    np.testing.assert_allclose(np.asarray(ct0), 0.0)

    print("KERNEL_OK")
</pallas_src>

<mosaic_0001>
module attributes {stable_mosaic.version = 11 : i64} {
  func.func @_attn_kernel(%arg0: i32, %arg1: memref<8x32xf32, #tpu.memory_space<vmem>>, %arg2: memref<8x8x32xf32, #tpu.memory_space<vmem>>, %arg3: memref<32x32xf32, #tpu.memory_space<vmem>>, %arg4: memref<32x32xf32, #tpu.memory_space<vmem>>, %arg5: memref<1x32xf32, #tpu.memory_space<vmem>>, %arg6: memref<1x32xf32, #tpu.memory_space<vmem>>, %arg7: memref<8x32xf32, #tpu.memory_space<vmem>>) attributes {dimension_semantics = [#tpu.dimension_semantics<parallel>], iteration_bounds = array<i64: 2>, scalar_prefetch = 0 : i64, scratch_operands = 0 : i64, tpu.core_type = #tpu.core_type<tc>, window_params = [{transform_indices = @transform_0, window_bounds = array<i64: 8, 32>}, {transform_indices = @transform_1, window_bounds = array<i64: 8, 8, 32>}, {pipeline_mode = #tpu.pipeline_mode<synchronous>, transform_indices = @transform_2, window_bounds = array<i64: 32, 32>}, {pipeline_mode = #tpu.pipeline_mode<synchronous>, transform_indices = @transform_3, window_bounds = array<i64: 32, 32>}, {pipeline_mode = #tpu.pipeline_mode<synchronous>, transform_indices = @transform_4, window_bounds = array<i64: 1, 32>}, {pipeline_mode = #tpu.pipeline_mode<synchronous>, transform_indices = @transform_5, window_bounds = array<i64: 1, 32>}, {transform_indices = @transform_6, window_bounds = array<i64: 8, 32>}]} {
    %c0 = arith.constant 0 : index
    %c0_0 = arith.constant 0 : index
    %c0_1 = arith.constant 0 : index
    %0 = vector.load %arg2[%c0, %c0_0, %c0_1] : memref<8x8x32xf32, #tpu.memory_space<vmem>>, vector<8x8x32xf32>
    %c0_2 = arith.constant 0 : index
    %c0_3 = arith.constant 0 : index
    %1 = vector.load %arg3[%c0_2, %c0_3] : memref<32x32xf32, #tpu.memory_space<vmem>>, vector<32x32xf32>
    %cst = arith.constant dense<0.000000e+00> : vector<8x8x32xf32>
    %2 = tpu.matmul %0, %1, %cst {dimension_numbers = #tpu.dot_dimension_numbers<[2], [0], [0, 1], [1], [0, 0, 0, 1, 1, 1], [], []>} : vector<8x8x32xf32>, vector<32x32xf32>, vector<8x8x32xf32> -> vector<8x8x32xf32>
    %c0_4 = arith.constant 0 : index
    %c0_5 = arith.constant 0 : index
    %3 = vector.load %arg1[%c0_4, %c0_5] : memref<8x32xf32, #tpu.memory_space<vmem>>, vector<8x32xf32>
    %c0_6 = arith.constant 0 : index
    %c0_7 = arith.constant 0 : index
    %4 = vector.load %arg4[%c0_6, %c0_7] : memref<32x32xf32, #tpu.memory_space<vmem>>, vector<32x32xf32>
    %cst_8 = arith.constant dense<0.000000e+00> : vector<8x32xf32>
    %5 = tpu.matmul %3, %4, %cst_8 {dimension_numbers = #tpu.dot_dimension_numbers<[1], [0], [0], [1], [0, 0, 1, 1], [], []>} : vector<8x32xf32>, vector<32x32xf32>, vector<8x32xf32> -> vector<8x32xf32>
    %c0_9 = arith.constant 0 : index
    %c0_10 = arith.constant 0 : index
    %6 = vector.load %arg5[%c0_9, %c0_10] : memref<1x32xf32, #tpu.memory_space<vmem>>, vector<1x32xf32>
    %7 = vector.broadcast %6 : vector<1x32xf32> to vector<8x32xf32>
    %8 = arith.addf %5, %7 : vector<8x32xf32>
    %9 = vector.shape_cast %8 : vector<8x32xf32> to vector<8x1x32xf32>
    %10 = vector.broadcast %9 : vector<8x1x32xf32> to vector<8x8x32xf32>
    %11 = arith.addf %2, %10 : vector<8x8x32xf32>
    %12 = math.tanh %11 : vector<8x8x32xf32>
    %c0_11 = arith.constant 0 : index
    %c0_12 = arith.constant 0 : index
    %13 = vector.load %arg6[%c0_11, %c0_12] : memref<1x32xf32, #tpu.memory_space<vmem>>, vector<1x32xf32>
    %14 = vector.shape_cast %13 : vector<1x32xf32> to vector<1x1x32xf32>
    %15 = vector.broadcast %14 : vector<1x1x32xf32> to vector<8x8x32xf32>
    %16 = arith.mulf %12, %15 : vector<8x8x32xf32>
    %cst_13 = arith.constant dense<0.000000e+00> : vector<8x8xf32>
    %17 = vector.multi_reduction <add>, %16, %cst_13 [2] : vector<8x8x32xf32> to vector<8x8xf32>
    %cst_14 = arith.constant dense<0xFF800000> : vector<8xf32>
    %18 = vector.multi_reduction <maximumf>, %17, %cst_14 [1] : vector<8x8xf32> to vector<8xf32>
    %19 = vector.shape_cast %18 : vector<8xf32> to vector<8x1xf32>
    %20 = vector.broadcast %19 : vector<8x1xf32> to vector<8x8xf32>
    %21 = arith.subf %17, %20 : vector<8x8xf32>
    %22 = math.exp %21 : vector<8x8xf32>
    %cst_15 = arith.constant dense<0.000000e+00> : vector<8xf32>
    %23 = vector.multi_reduction <add>, %22, %cst_15 [1] : vector<8x8xf32> to vector<8xf32>
    %24 = vector.shape_cast %23 : vector<8xf32> to vector<8x1xf32>
    %25 = tpu.reciprocal %24 {approx = true} : vector<8x1xf32> -> vector<8x1xf32>
    %26 = vector.broadcast %25 : vector<8x1xf32> to vector<8x8xf32>
    %27 = arith.mulf %22, %26 : vector<8x8xf32>
    %28 = vector.shape_cast %27 : vector<8x8xf32> to vector<8x8x1xf32>
    %29 = vector.broadcast %28 : vector<8x8x1xf32> to vector<8x8x32xf32>
    %30 = arith.mulf %29, %0 : vector<8x8x32xf32>
    %cst_16 = arith.constant dense<0.000000e+00> : vector<8x32xf32>
    %31 = vector.multi_reduction <add>, %30, %cst_16 [1] : vector<8x8x32xf32> to vector<8x32xf32>
    %c0_17 = arith.constant 0 : index
    %c0_18 = arith.constant 0 : index
    %32 = vector.load %arg7[%c0_17, %c0_18] : memref<8x32xf32, #tpu.memory_space<vmem>>, vector<8x32xf32>
    tpu.vector_store %arg7[%c0_17, %c0_18], %31 {strides = array<i32>} : memref<8x32xf32, #tpu.memory_space<vmem>>, vector<8x32xf32>,
    return
  }
  func.func @transform_0(%arg0: i32) -> (i32, i32) {
    %c0_i32 = arith.constant 0 : i32
    %c0_i32_0 = arith.constant 0 : i32
    return %arg0, %c0_i32 : i32, i32
  }
  func.func @transform_1(%arg0: i32) -> (i32, i32, i32) {
    %c0_i32 = arith.constant 0 : i32
    %c0_i32_0 = arith.constant 0 : i32
    %c0_i32_1 = arith.constant 0 : i32
    return %arg0, %c0_i32, %c0_i32_0 : i32, i32, i32
  }
  func.func @transform_2(%arg0: i32) -> (i32, i32) {
    %c0_i32 = arith.constant 0 : i32
    %c0_i32_0 = arith.constant 0 : i32
    %c0_i32_1 = arith.constant 0 : i32
    return %c0_i32, %c0_i32_0 : i32, i32
  }
  func.func @transform_3(%arg0: i32) -> (i32, i32) {
    %c0_i32 = arith.constant 0 : i32
    %c0_i32_0 = arith.constant 0 : i32
    %c0_i32_1 = arith.constant 0 : i32
    return %c0_i32, %c0_i32_0 : i32, i32
  }
  func.func @transform_4(%arg0: i32) -> (i32, i32) {
    %c0_i32 = arith.constant 0 : i32
    %c0_i32_0 = arith.constant 0 : i32
    %c0_i32_1 = arith.constant 0 : i32
    return %c0_i32, %c0_i32_0 : i32, i32
  }
  func.func @transform_5(%arg0: i32) -> (i32, i32) {
    %c0_i32 = arith.constant 0 : i32
    %c0_i32_0 = arith.constant 0 : i32
    %c0_i32_1 = arith.constant 0 : i32
    return %c0_i32, %c0_i32_0 : i32, i32
  }
  func.func @transform_6(%arg0: i32) -> (i32, i32) {
    %c0_i32 = arith.constant 0 : i32
    %c0_i32_0 = arith.constant 0 : i32
    return %arg0, %c0_i32 : i32, i32
  }
}

</mosaic_0001>

<llo_original>
// kernel: decoder_attention_forward.1
$region0: #{decoder_attention_forward.1}
  #allocation0 [shape = 'u32[]', space=smem, size = 0x4, offset = 0x4, fixed_abs, tag = 'smem constant byte address 0x4 - core index']
  #allocation1 [shape = 'u32[72,128]{1,0:T(1,128)}', space=vmem, size = 0x9000, scoped, tag = 'internal scratch']
  %s0 = inlined_call_operand.vmem [shape: f32[16,32], index: 0, kind: input, shape index: {}]
  %s1 = inlined_call_operand.vmem [shape: f32[16,8,32], index: 1, kind: input, shape index: {}]
  %s2 = inlined_call_operand.vmem [shape: f32[32,32], index: 2, kind: input, shape index: {}]
  %s3 = inlined_call_operand.vmem [shape: f32[32,32], index: 3, kind: input, shape index: {}]
  %s4 = inlined_call_operand.vmem [shape: f32[1,32], index: 4, kind: input, shape index: {}]
  %s5 = inlined_call_operand.vmem [shape: f32[1,32], index: 5, kind: input, shape index: {}]
  %s6 = inlined_call_operand.hbm [shape: f32[16,32], index: 6, kind: output, shape index: {}]
  %s7 = sld [smem:[#allocation0]]
  $region57: #{decoder_attention_forward.1} parent=0
    _
  %s9 = ssub.s32 1, %s7
  %s10 = scalar_select 0, %s9, %s7
  $region1: #{decoder_attention_forward.1} parent=0
    #allocation2 [shape = 'u8[8192]{0}', space=vmem, size = 0x2000, scoped, tag = 'output window, operand 0']
    #allocation3 [shape = 's32[2]{0}', space=sflag, size = 0x8, scoped, tag = 'scoped memory for decoder_attention_forward.1']
    %11 = vsyncpa [#allocation3], 0
    %s12 = scalar_lea.sflag [#allocation3], 1
    %13 = vsyncpa %s12, 0
    loop: start=0, step=1, limit=4
    $region2: #{decoder_attention_forward.1} parent=1 // loop_pre_header
      _
    $region3: #{decoder_attention_forward.1} parent=1 // loop_header
      %s15 = sphi 0, %s19
      %p16 = scmp.ge.s32.totalorder %s15, 4
      %s25 = sphi 0, %s27
      %s28 = sphi 0, %s25
      %s29 = sphi 0, %s28
      %s45 = sphi 0, %s29
      %s51 = sphi 0, %s53
      %s54 = sphi 0, %s51
      %s55 = sphi 0, %s54
      %s71 = sphi 0, %s55
      %s75 = sphi 0, %s75
      %s77 = sphi 0, %s75
      %s78 = sphi 0, %s77
      %s92 = sphi 0, %s78
      %s96 = sphi 0, %s96
      %s98 = sphi 0, %s96
      %s99 = sphi 0, %s98
      %s113 = sphi 0, %s99
      %s117 = sphi 0, %s117
      %s119 = sphi 0, %s117
      %s120 = sphi 0, %s119
      %s134 = sphi 0, %s120
      %s138 = sphi 0, %s138
      %s140 = sphi 0, %s138
      %s141 = sphi 0, %s140
      %s155 = sphi 0, %s141
      %s161 = sphi 0, %s163
      %s164 = sphi 0, %s161
      %s165 = sphi 0, %s164
      %s181 = sphi 0, %s165
    $region4: #{decoder_attention_forward.1} parent=1 // loop_header_branch
      %18 = sbr.rel (%p16) target = $region8
    $region5: #{decoder_attention_forward.1} parent=1 // loop_body
      %s20 = ssub.s32 %s15, 1
      %s21 = ssub.s32 %s15, 2
      %s22 = sadd.s32 %s15, 1
      %s23 = ssub.s32 %s15, %s22
      %p24 = scmp.eq.s32.totalorder %s23, 0
      %s26 = sadd.s32 %s25, 1
      %s27 = scalar_select %p24, %s25, %s26
      %p30 = pneg %p24
      %p31 = scmp.eq.s32.totalorder %s15, 1
      %p32 = por %p30, %p31
      %p33 = scmp.ne.s32.totalorder %s25, %s28
      %p34 = scmp.eq.s32.totalorder %s15, 0
      %p35 = por %p33, %p34
      %p36 = scmp.ne.s32.totalorder %s25, %s28
      %p37 = scmp.eq.s32.totalorder %s20, 1
      %p38 = por %p36, %p37
      %p39 = scmp.ne.s32.totalorder %s28, %s29
      %p40 = scmp.eq.s32.totalorder %s20, 0
      %p41 = por %p39, %p40
      %p42 = scmp.ne.s32.totalorder %s28, %s29
      %p43 = scmp.eq.s32.totalorder %s21, 1
      %p44 = por %p42, %p43
      %p46 = scmp.ne.s32.totalorder %s29, %s45
      %p47 = scmp.eq.s32.totalorder %s21, 0
      %p48 = por %p46, %p47
      %s49 = ssub.s32 %s15, %s22
      %p50 = scmp.eq.s32.totalorder %s49, 0
      %s52 = sadd.s32 %s51, 1
      %s53 = scalar_select %p50, %s51, %s52
      %p56 = pneg %p50
      %p57 = scmp.eq.s32.totalorder %s15, 1
      %p58 = por %p56, %p57
      %p59 = scmp.ne.s32.totalorder %s51, %s54
      %p60 = scmp.eq.s32.totalorder %s15, 0
      %p61 = por %p59, %p60
      %p62 = scmp.ne.s32.totalorder %s51, %s54
      %p63 = scmp.eq.s32.totalorder %s20, 1
      %p64 = por %p62, %p63
      %p65 = scmp.ne.s32.totalorder %s54, %s55
      %p66 = scmp.eq.s32.totalorder %s20, 0
      %p67 = por %p65, %p66
      %p68 = scmp.ne.s32.totalorder %s54, %s55
      %p69 = scmp.eq.s32.totalorder %s21, 1
      %p70 = por %p68, %p69
      %p72 = scmp.ne.s32.totalorder %s55, %s71
      %p73 = scmp.eq.s32.totalorder %s21, 0
      %p74 = por %p72, %p73
      %s76 = sadd.s32 %s75, 1
      %p79 = scmp.eq.s32.totalorder %s15, 1
      %p80 = scmp.ne.s32.totalorder %s75, %s77
      %p81 = scmp.eq.s32.totalorder %s15, 0
      %p82 = por %p80, %p81
      %p83 = scmp.ne.s32.totalorder %s75, %s77
      %p84 = scmp.eq.s32.totalorder %s20, 1
      %p85 = por %p83, %p84
      %p86 = scmp.ne.s32.totalorder %s77, %s78
      %p87 = scmp.eq.s32.totalorder %s20, 0
      %p88 = por %p86, %p87
      %p89 = scmp.ne.s32.totalorder %s77, %s78
      %p90 = scmp.eq.s32.totalorder %s21, 1
      %p91 = por %p89, %p90
      %p93 = scmp.ne.s32.totalorder %s78, %s92
      %p94 = scmp.eq.s32.totalorder %s21, 0
      %p95 = por %p93, %p94
      %s97 = sadd.s32 %s96, 1
      %p100 = scmp.eq.s32.totalorder %s15, 1
      %p101 = scmp.ne.s32.totalorder %s96, %s98
      %p102 = scmp.eq.s32.totalorder %s15, 0
      %p103 = por %p101, %p102
      %p104 = scmp.ne.s32.totalorder %s96, %s98
      %p105 = scmp.eq.s32.totalorder %s20, 1
      %p106 = por %p104, %p105
      %p107 = scmp.ne.s32.totalorder %s98, %s99
      %p108 = scmp.eq.s32.totalorder %s20, 0
      %p109 = por %p107, %p108
      %p110 = scmp.ne.s32.totalorder %s98, %s99
      %p111 = scmp.eq.s32.totalorder %s21, 1
      %p112 = por %p110, %p111
      %p114 = scmp.ne.s32.totalorder %s99, %s113
      %p115 = scmp.eq.s32.totalorder %s21, 0
      %p116 = por %p114, %p115
      %s118 = sadd.s32 %s117, 1
      %p121 = scmp.eq.s32.totalorder %s15, 1
      %p122 = scmp.ne.s32.totalorder %s117, %s119
      %p123 = scmp.eq.s32.totalorder %s15, 0
      %p124 = por %p122, %p123
      %p125 = scmp.ne.s32.totalorder %s117, %s119
      %p126 = scmp.eq.s32.totalorder %s20, 1
      %p127 = por %p125, %p126
      %p128 = scmp.ne.s32.totalorder %s119, %s120
      %p129 = scmp.eq.s32.totalorder %s20, 0
      %p130 = por %p128, %p129
      %p131 = scmp.ne.s32.totalorder %s119, %s120
      %p132 = scmp.eq.s32.totalorder %s21, 1
      %p133 = por %p131, %p132
      %p135 = scmp.ne.s32.totalorder %s120, %s134
      %p136 = scmp.eq.s32.totalorder %s21, 0
      %p137 = por %p135, %p136
      %s139 = sadd.s32 %s138, 1
      %p142 = scmp.eq.s32.totalorder %s15, 1
      %p143 = scmp.ne.s32.totalorder %s138, %s140
      %p144 = scmp.eq.s32.totalorder %s15, 0
      %p145 = por %p143, %p144
      %p146 = scmp.ne.s32.totalorder %s138, %s140
      %p147 = scmp.eq.s32.totalorder %s20, 1
      %p148 = por %p146, %p147
      %p149 = scmp.ne.s32.totalorder %s140, %s141
      %p150 = scmp.eq.s32.totalorder %s20, 0
      %p151 = por %p149, %p150
      %p152 = scmp.ne.s32.totalorder %s140, %s141
      %p153 = scmp.eq.s32.totalorder %s21, 1
      %p154 = por %p152, %p153
      %p156 = scmp.ne.s32.totalorder %s141, %s155
      %p157 = scmp.eq.s32.totalorder %s21, 0
      %p158 = por %p156, %p157
      %s159 = ssub.s32 %s15, %s22
      %p160 = scmp.eq.s32.totalorder %s159, 0
      %s162 = sadd.s32 %s161, 1
      %s163 = scalar_select %p160, %s161, %s162
      %p166 = pneg %p160
      %p167 = scmp.eq.s32.totalorder %s15, 1
      %p168 = por %p166, %p167
      %p169 = scmp.ne.s32.totalorder %s161, %s164
      %p170 = scmp.eq.s32.totalorder %s15, 0
      %p171 = por %p169, %p170
      %p172 = scmp.ne.s32.totalorder %s161, %s164
      %p173 = scmp.eq.s32.totalorder %s20, 1
      %p174 = por %p172, %p173
      %p175 = scmp.ne.s32.totalorder %s164, %s165
      %p176 = scmp.eq.s32.totalorder %s20, 0
      %p177 = por %p175, %p176
      %p178 = scmp.ne.s32.totalorder %s164, %s165
      %p179 = scmp.eq.s32.totalorder %s21, 1
      %p180 = por %p178, %p179
      %p182 = scmp.ne.s32.totalorder %s165, %s181
      %p183 = scmp.eq.s32.totalorder %s21, 0
      %p184 = por %p182, %p183
      %p185 = scmp.le.s32.totalorder 1, %s15
      %p186 = scmp.lt.s32.totalorder %s15, 3
      %p187 = pnand %p185, %p186
      %p188 = pneg %p187
      // Predicated region
      $region9: #{decoder_attention_forward.1} parent=5 // pred_check
        _
      $region10: #{decoder_attention_forward.1} parent=5 // pred_check_branch
        %190 = sbr.rel (%p187) target = $region12
      $region11: #{decoder_attention_forward.1} parent=5 // pred_region
        %s191 = ssub.s32 %s15, 1
        // Predicated region
        $region13: #{decoder_attention_forward.1} parent=11 // pred_check
          %p192 = pneg %p88
        $region14: #{decoder_attention_forward.1} parent=11 // pred_check_branch
          %194 = sbr.rel (%p192) target = $region16
        $region15: #{decoder_attention_forward.1} parent=11 // pred_region
          _
        $region16: #{decoder_attention_forward.1} parent=11 // pred_fallthru
          _
        // Predicated region
        $region17: #{decoder_attention_forward.1} parent=11 // pred_check
          %p195 = pneg %p109
        $region18: #{decoder_attention_forward.1} parent=11 // pred_check_branch
          %197 = sbr.rel (%p195) target = $region20
        $region19: #{decoder_attention_forward.1} parent=11 // pred_region
          _
        $region20: #{decoder_attention_forward.1} parent=11 // pred_fallthru
          _
        // Predicated region
        $region21: #{decoder_attention_forward.1} parent=11 // pred_check
          %p198 = pneg %p130
        $region22: #{decoder_attention_forward.1} parent=11 // pred_check_branch
          %200 = sbr.rel (%p198) target = $region24
        $region23: #{decoder_attention_forward.1} parent=11 // pred_region
          _
        $region24: #{decoder_attention_forward.1} parent=11 // pred_fallthru
          _
        // Predicated region
        $region25: #{decoder_attention_forward.1} parent=11 // pred_check
          %p201 = pneg %p151
        $region26: #{decoder_attention_forward.1} parent=11 // pred_check_branch
          %203 = sbr.rel (%p201) target = $region28
        $region27: #{decoder_attention_forward.1} parent=11 // pred_region
          _
        $region28: #{decoder_attention_forward.1} parent=11 // pred_fallthru
          _
      $region12: #{decoder_attention_forward.1} parent=5 // pred_fallthru
        _
      %p204 = scmp.lt.s32.totalorder %s15, 2
      // Predicated region
      $region29: #{decoder_attention_forward.1} parent=5 // pred_check
        %p205 = pneg %p204
      $region30: #{decoder_attention_forward.1} parent=5 // pred_check_branch
        %207 = sbr.rel (%p205) target = $region32
      $region31: #{decoder_attention_forward.1} parent=5 // pred_region
        // Predicated region
        $region33: #{decoder_attention_forward.1} parent=31 // pred_check
          %p208 = pneg %p35
        $region34: #{decoder_attention_forward.1} parent=31 // pred_check_branch
          %210 = sbr.rel (%p208) target = $region36
        $region35: #{decoder_attention_forward.1} parent=31 // pred_region
          %p211 = scmp.lt.s32.totalorder %s15, 1
          %s212 = scalar_select %p211, %s15, 1
          %s213 = smul.addr %s212, 8
          %s214 = scalar_lea.vmem %s0, %s213
        $region36: #{decoder_attention_forward.1} parent=31 // pred_fallthru
          _
        // Predicated region
        $region37: #{decoder_attention_forward.1} parent=31 // pred_check
          %p215 = pneg %p61
        $region38: #{decoder_attention_forward.1} parent=31 // pred_check_branch
          %217 = sbr.rel (%p215) target = $region40
        $region39: #{decoder_attention_forward.1} parent=31 // pred_region
          %s218 = smul.u32 8, %s15
          %p219 = scmp.lt.s32.totalorder %s218, 15
          %s220 = scalar_select %p219, %s218, 15
          %s221 = smul.addr %s220, 8
          %s222 = scalar_lea.vmem %s1, %s221
          %s223 = smul.u32 8, %s15
        $region40: #{decoder_attention_forward.1} parent=31 // pred_fallthru
          _
      $region32: #{decoder_attention_forward.1} parent=5 // pred_fallthru
        _
      %p224 = scmp.le.s32.totalorder 1, %s15
      %p225 = scmp.lt.s32.totalorder %s15, 3
      %p226 = pnand %p224, %p225
      %p227 = pneg %p226
      // Predicated region
      $region41: #{decoder_attention_forward.1} parent=5 // pred_check
        _
      $region42: #{decoder_attention_forward.1} parent=5 // pred_check_branch
        %229 = sbr.rel (%p226) target = $region44
      $region43: #{decoder_attention_forward.1} parent=5 // pred_region
        %s230 = ssub.s32 %s15, 1
        %p231 = scmp.lt.s32.totalorder %s20, 1
        %s232 = scalar_select %p231, %s20, 1
        %s233 = smul.addr %s232, 8
        %s234 = scalar_lea.vmem %s0, %s233
        %p235 = pneg %p41
        %p236 = pneg %p38
        %s237 = smul.u32 8, %s20
        %p238 = scmp.lt.s32.totalorder %s237, 15
        %s239 = scalar_select %p238, %s237, 15
        %s240 = smul.addr %s239, 8
        %s241 = scalar_lea.vmem %s1, %s240
        %p242 = pneg %p67
        %p243 = pneg %p64
        %p244 = pneg %p88
        %p245 = pneg %p85
        %p246 = pneg %p109
        %p247 = pneg %p106
        %p248 = pneg %p130
        %p249 = pneg %p127
        %p250 = pneg %p151
        %p251 = pneg %p148
        %p252 = pneg %p177
        %p253 = pneg %p174
        %s254 = sand.u32 %s164, 1
        %s255 = scalar_lea.sflag [#allocation3], %s254
        %s256 = sand.u32 %s164, 1
        %s257 = smul.addr %s256, 8
        %s258 = scalar_lea.vmem [#allocation2], %s257
        %p259 = scmp.lt.s32.totalorder %s20, 1
        %s260 = scalar_select %p259, %s20, 1
        %s261 = smul.addr %s260, 8
        %s262 = scalar_lea.vmem %s0, %s261
        %s263 = smul.u32 8, %s20
        %p264 = scmp.lt.s32.totalorder %s263, 15
        %s265 = scalar_select %p264, %s263, 15
        %s266 = smul.addr %s265, 8
        %s267 = scalar_lea.vmem %s1, %s266
        %s268 = smul.u32 8, %s20
        %v269 = vld [vmem:[%s267] sm:$0xff]
        %v270 = vld [vmem:[%s267 + $0x8] sm:$0xff]
        %v271 = vld [vmem:[%s267 + $0x10] sm:$0xff]
        %v272 = vld [vmem:[%s267 + $0x18] sm:$0xff]
        %v273 = vld [vmem:[%s267 + $0x20] sm:$0xff]
        %v274 = vld [vmem:[%s267 + $0x28] sm:$0xff]
        %v275 = vld [vmem:[%s267 + $0x30] sm:$0xff]
        %v276 = vld [vmem:[%s267 + $0x38] sm:$0xff]
        %v277 = vld [vmem:[%s2] sm:$0xff]
        %v278 = vld [vmem:[%s2 + $0x8] sm:$0xff]
        %v279 = vld [vmem:[%s2 + $0x10] sm:$0xff]
        %v280 = vld [vmem:[%s2 + $0x18] sm:$0xff]
        %v281 = vld [vmem:[%s262] sm:$0xff]
        %v282 = vld [vmem:[%s3] sm:$0xff]
        %v283 = vld [vmem:[%s3 + $0x8] sm:$0xff]
        %v284 = vld [vmem:[%s3 + $0x10] sm:$0xff]
        %v285 = vld [vmem:[%s3 + $0x18] sm:$0xff]
        %v286 = vld [vmem:[%s4] sm:$0x1]
        %v288 = vperm.slane %v286, 0
        %vm290 = vcmask 261120
        %v292 = vsel %vm290, %v281, 0
        %294 = vmatpush.msra.mxu0 0.0
        %295 = vmatpush.msra.mxu0 0.0
        %296 = vmatpush.msra.mxu0 0.0
        %297 = vmatpush.msra.mxu0 0.0
        %298 = vmatpush.msra.mxu0 0.0
        %299 = vmatpush.msra.mxu0 0.0
        %300 = vmatpush.msra.mxu0 0.0
        %301 = vmatpush.msra.mxu0 0.0
        %302 = vmatpush.msra.mxu0 0.0
        %303 = vmatpush.msra.mxu0 0.0
        %304 = vmatpush.msra.mxu0 0.0
        %305 = vmatpush.msra.mxu0 0.0
        %306 = vmatpush.msra.mxu0 %v285
        %307 = vmatpush.msra.mxu0 %v284
        %308 = vmatpush.msra.mxu0 %v283
        %309 = vmatpush.msra.mxu0 %v282
        %310 = vmatmul.f32.gmra.mxu0 %v292
        %v311 = vpop.f32.mrf.mxu0
        %v312 = vadd.f32 %v288, %v311
        %313 = vdwg.mxu0
        %v315 = vrot.slane %v312, 1
        %v316 = vrot.slane %v312, 2
        %v317 = vrot.slane %v312, 3
        %v318 = vrot.slane %v312, 4
        %v319 = vrot.slane %v312, 5
        %v320 = vrot.slane %v312, 6
        %v321 = vrot.slane %v312, 7
        %v322 = vperm.slane %v312, 0
        %v323 = vperm.slane %v315, 0
        %v324 = vperm.slane %v316, 0
        %v325 = vperm.slane %v317, 0
        %v326 = vperm.slane %v318, 0
        %v327 = vperm.slane %v319, 0
        %v328 = vperm.slane %v320, 0
        %v329 = vperm.slane %v321, 0
        %v339 = vsel %vm290, %v269, 0
        %v342 = vsel %vm290, %v270, 0
        %v345 = vsel %vm290, %v271, 0
        %v348 = vsel %vm290, %v272, 0
        %v351 = vsel %vm290, %v273, 0
        %v354 = vsel %vm290, %v274, 0
        %v357 = vsel %vm290, %v275, 0
        %v360 = vsel %vm290, %v276, 0
        %362 = vmatpush.msra.mxu0 0.0
        %363 = vmatpush.msra.mxu0 0.0
        %364 = vmatpush.msra.mxu0 0.0
        %365 = vmatpush.msra.mxu0 0.0
        %366 = vmatpush.msra.mxu0 0.0
        %367 = vmatpush.msra.mxu0 0.0
        %368 = vmatpush.msra.mxu0 0.0
        %369 = vmatpush.msra.mxu0 0.0
        %370 = vmatpush.msra.mxu0 0.0
        %371 = vmatpush.msra.mxu0 0.0
        %372 = vmatpush.msra.mxu0 0.0
        %373 = vmatpush.msra.mxu0 0.0
        %374 = vmatpush.msra.mxu0 %v280
        %375 = vmatpush.msra.mxu0 %v279
        %376 = vmatpush.msra.mxu0 %v278
        %377 = vmatpush.msra.mxu0 %v277
        %378 = vmatmul.f32.gmra.mxu0 %v339
        %v379 = vpop.f32.mrf.mxu0
        %v380 = vadd.f32 %v322, %v379
        %381 = vmatmul.f32.gmra.mxu0 %v342
        %v382 = vpop.f32.mrf.mxu0
        %v383 = vadd.f32 %v323, %v382
        %384 = vmatmul.f32.gmra.mxu0 %v345
        %v385 = vpop.f32.mrf.mxu0
        %v386 = vadd.f32 %v324, %v385
        %387 = vmatmul.f32.gmra.mxu0 %v348
        %v388 = vpop.f32.mrf.mxu0
        %v389 = vadd.f32 %v325, %v388
        %390 = vmatmul.f32.gmra.mxu0 %v351
        %v391 = vpop.f32.mrf.mxu0
        %v392 = vadd.f32 %v326, %v391
        %393 = vmatmul.f32.gmra.mxu0 %v354
        %v394 = vpop.f32.mrf.mxu0
        %v395 = vadd.f32 %v327, %v394
        %396 = vmatmul.f32.gmra.mxu0 %v357
        %v397 = vpop.f32.mrf.mxu0
        %v398 = vadd.f32 %v328, %v397
        %399 = vmatmul.f32.gmra.mxu0 %v360
        %v400 = vpop.f32.mrf.mxu0
        %v401 = vadd.f32 %v329, %v400
        %402 = vdwg.mxu0
        %v403 = vtanh.pop %v380
        %v404 = vtanh.pop %v383
        %v405 = vtanh.pop %v386
        %v406 = vtanh.pop %v389
        %v407 = vtanh.pop %v392
        %v408 = vtanh.pop %v395
        %v409 = vtanh.pop %v398
        %v410 = vtanh.pop %v401
        %v411 = vld [vmem:[%s5] sm:$0x1]
        %v413 = vperm.slane %v411, 0
        %v415 = vmul.f32 %v403, %v413
        %v416 = vmul.f32 %v404, %v413
        %v417 = vmul.f32 %v405, %v413
        %v418 = vmul.f32 %v406, %v413
        %v419 = vmul.f32 %v407, %v413
        %v420 = vmul.f32 %v408, %v413
        %v421 = vmul.f32 %v409, %v413
        %v422 = vmul.f32 %v410, %v413
        %v423 = vsel %vm290, %v415, 0.0
        %424 = vadd.xlane.f32.xlu0 %v423
        %v425 = vpop.xlane.xlu0 %424
        %v426 = vsel %vm290, %v416, 0.0
        %427 = vadd.xlane.f32.xlu0 %v426
        %v428 = vpop.xlane.xlu0 %427
        %v429 = vsel %vm290, %v417, 0.0
        %430 = vadd.xlane.f32.xlu0 %v429
        %v431 = vpop.xlane.xlu0 %430
        %v432 = vsel %vm290, %v418, 0.0
        %433 = vadd.xlane.f32.xlu0 %v432
        %v434 = vpop.xlane.xlu0 %433
        %v435 = vsel %vm290, %v419, 0.0
        %436 = vadd.xlane.f32.xlu0 %v435
        %v437 = vpop.xlane.xlu0 %436
        %v438 = vsel %vm290, %v420, 0.0
        %439 = vadd.xlane.f32.xlu0 %v438
        %v440 = vpop.xlane.xlu0 %439
        %v441 = vsel %vm290, %v421, 0.0
        %442 = vadd.xlane.f32.xlu0 %v441
        %v443 = vpop.xlane.xlu0 %442
        %v444 = vsel %vm290, %v422, 0.0
        %445 = vadd.xlane.f32.xlu0 %v444
        %v446 = vpop.xlane.xlu0 %445
        %v455 = vlaneseq
        %v456 = vand.u32 %v455, 127
        %v457 = vperm.slane %v425, %v456
        %v458 = vperm.slane %v428, %v456
        %v459 = vperm.slane %v431, %v456
        %v460 = vperm.slane %v434, %v456
        %v461 = vperm.slane %v437, %v456
        %v462 = vperm.slane %v440, %v456
        %v463 = vperm.slane %v443, %v456
        %v464 = vperm.slane %v446, %v456
        %vm465 = vcmask 1041409
        %v466 = vsel %vm465, %v458, %v457
        %vm467 = vcmask 1042434
        %v468 = vsel %vm467, %v459, %v466
        %vm469 = vcmask 1043459
        %v470 = vsel %vm469, %v460, %v468
        %vm471 = vcmask 1044484
        %v472 = vsel %vm471, %v461, %v470
        %vm473 = vcmask 1045509
        %v474 = vsel %vm473, %v462, %v472
        %vm475 = vcmask 1046534
        %v476 = vsel %vm475, %v463, %v474
        %vm477 = vcmask 1047559
        %v478 = vsel %vm477, %v464, %v476
        %vm480 = vcmask 64512
        %v481 = vsel %vm480, %v478, -inf
        %482 = vmax.xlane.f32.xlu0 %v481
        %v483 = vpop.xlane.xlu0 %482
        %v485 = vperm.slane %v483, 0
        %v486 = vperm.slane %v483, 1
        %v487 = vperm.slane %v483, 2
        %v488 = vperm.slane %v483, 3
        %v489 = vperm.slane %v483, 4
        %v490 = vperm.slane %v483, 5
        %v491 = vperm.slane %v483, 6
        %v492 = vperm.slane %v483, 7
        %v501 = vsub.f32 %v425, %v485
        %v502 = vsub.f32 %v428, %v486
        %v503 = vsub.f32 %v431, %v487
        %v504 = vsub.f32 %v434, %v488
        %v505 = vsub.f32 %v437, %v489
        %v506 = vsub.f32 %v440, %v490
        %v507 = vsub.f32 %v443, %v491
        %v508 = vsub.f32 %v446, %v492
        %v509 = vmul.f32 %v501, 1.442695
        %v510 = vpow.pop %v509
        %v511 = vmul.f32 %v502, 1.442695
        %v512 = vpow.pop %v511
        %v513 = vmul.f32 %v503, 1.442695
        %v514 = vpow.pop %v513
        %v515 = vmul.f32 %v504, 1.442695
        %v516 = vpow.pop %v515
        %v517 = vmul.f32 %v505, 1.442695
        %v518 = vpow.pop %v517
        %v519 = vmul.f32 %v506, 1.442695
        %v520 = vpow.pop %v519
        %v521 = vmul.f32 %v507, 1.442695
        %v522 = vpow.pop %v521
        %v523 = vmul.f32 %v508, 1.442695
        %v524 = vpow.pop %v523
        %533 = vset.pattern.permute.xlu0 0
        %534 = vperm.xlu0 %533, %v510
        %v535 = vpop.permute.xlu0 %534
        %536 = vset.pattern.permute.xlu0 0
        %537 = vperm.xlu0 %536, %v512
        %v538 = vpop.permute.xlu0 %537
        %539 = vset.pattern.permute.xlu0 0
        %540 = vperm.xlu0 %539, %v514
        %v541 = vpop.permute.xlu0 %540
        %542 = vset.pattern.permute.xlu0 0
        %543 = vperm.xlu0 %542, %v516
        %v544 = vpop.permute.xlu0 %543
        %545 = vset.pattern.permute.xlu0 0
        %546 = vperm.xlu0 %545, %v518
        %v547 = vpop.permute.xlu0 %546
        %548 = vset.pattern.permute.xlu0 0
        %549 = vperm.xlu0 %548, %v520
        %v550 = vpop.permute.xlu0 %549
        %551 = vset.pattern.permute.xlu0 0
        %552 = vperm.xlu0 %551, %v522
        %v553 = vpop.permute.xlu0 %552
        %554 = vset.pattern.permute.xlu0 0
        %555 = vperm.xlu0 %554, %v524
        %v556 = vpop.permute.xlu0 %555
        %v557 = vperm.slane %v535, %v456
        %v558 = vperm.slane %v538, %v456
        %v559 = vperm.slane %v541, %v456
        %v560 = vperm.slane %v544, %v456
        %v561 = vperm.slane %v547, %v456
        %v562 = vperm.slane %v550, %v456
        %v563 = vperm.slane %v553, %v456
        %v564 = vperm.slane %v556, %v456
        %v565 = vsel %vm465, %v558, %v557
        %v566 = vsel %vm467, %v559, %v565
        %v567 = vsel %vm469, %v560, %v566
        %v568 = vsel %vm471, %v561, %v567
        %v569 = vsel %vm473, %v562, %v568
        %v570 = vsel %vm475, %v563, %v569
        %v571 = vsel %vm477, %v564, %v570
        %v573 = vsel %vm480, %v571, 0.0
        %574 = vadd.xlane.f32.xlu0 %v573
        %v575 = vpop.xlane.xlu0 %574
        %v576 = vrcp.pop %v575
        %v578 = vperm.slane %v576, 0
        %v579 = vperm.slane %v576, 1
        %v580 = vperm.slane %v576, 2
        %v581 = vperm.slane %v576, 3
        %v582 = vperm.slane %v576, 4
        %v583 = vperm.slane %v576, 5
        %v584 = vperm.slane %v576, 6
        %v585 = vperm.slane %v576, 7
        %v594 = vmul.f32 %v510, %v578
        %v595 = vmul.f32 %v512, %v579
        %v596 = vmul.f32 %v514, %v580
        %v597 = vmul.f32 %v516, %v581
        %v598 = vmul.f32 %v518, %v582
        %v599 = vmul.f32 %v520, %v583
        %v600 = vmul.f32 %v522, %v584
        %v601 = vmul.f32 %v524, %v585
        %603 = vset.pattern.permute.xlu0 0
        %604 = vperm.xlu0 %603, %v594
        %v605 = vpop.permute.xlu0 %604
        %608 = vset.pattern.permute.xlu0 0
        %609 = vperm.xlu0 %608, %v595
        %v610 = vpop.permute.xlu0 %609
        %613 = vset.pattern.permute.xlu0 0
        %614 = vperm.xlu0 %613, %v596
        %v615 = vpop.permute.xlu0 %614
        %618 = vset.pattern.permute.xlu0 0
        %619 = vperm.xlu0 %618, %v597
        %v620 = vpop.permute.xlu0 %619
        %623 = vset.pattern.permute.xlu0 0
        %624 = vperm.xlu0 %623, %v598
        %v625 = vpop.permute.xlu0 %624
        %628 = vset.pattern.permute.xlu0 0
        %629 = vperm.xlu0 %628, %v599
        %v630 = vpop.permute.xlu0 %629
        %633 = vset.pattern.permute.xlu0 0
        %634 = vperm.xlu0 %633, %v600
        %v635 = vpop.permute.xlu0 %634
        %638 = vset.pattern.permute.xlu0 0
        %639 = vperm.xlu0 %638, %v601
        %v640 = vpop.permute.xlu0 %639
        %v642 = vmul.f32 %v605, %v269
        %v643 = vmul.f32 %v610, %v270
        %v644 = vmul.f32 %v615, %v271
        %v645 = vmul.f32 %v620, %v272
        %v646 = vmul.f32 %v625, %v273
        %v647 = vmul.f32 %v630, %v274
        %v648 = vmul.f32 %v635, %v275
        %v649 = vmul.f32 %v640, %v276
        %v650 = vsel %vm290, %v642, 0.0
        %v651 = vrot.slane %v650, 4
        %v652 = vadd.f32 %v650, %v651
        %v653 = vrot.slane %v652, 2
        %v654 = vadd.f32 %v652, %v653
        %v655 = vrot.slane %v654, 1
        %v656 = vadd.f32 %v654, %v655
        %v657 = vsel %vm290, %v643, 0.0
        %v658 = vrot.slane %v657, 4
        %v659 = vadd.f32 %v657, %v658
        %v660 = vrot.slane %v659, 2
        %v661 = vadd.f32 %v659, %v660
        %v662 = vrot.slane %v661, 1
        %v663 = vadd.f32 %v661, %v662
        %v664 = vsel %vm290, %v644, 0.0
        %v665 = vrot.slane %v664, 4
        %v666 = vadd.f32 %v664, %v665
        %v667 = vrot.slane %v666, 2
        %v668 = vadd.f32 %v666, %v667
        %v669 = vrot.slane %v668, 1
        %v670 = vadd.f32 %v668, %v669
        %v671 = vsel %vm290, %v645, 0.0
        %v672 = vrot.slane %v671, 4
        %v673 = vadd.f32 %v671, %v672
        %v674 = vrot.slane %v673, 2
        %v675 = vadd.f32 %v673, %v674
        %v676 = vrot.slane %v675, 1
        %v677 = vadd.f32 %v675, %v676
        %v678 = vsel %vm290, %v646, 0.0
        %v679 = vrot.slane %v678, 4
        %v680 = vadd.f32 %v678, %v679
        %v681 = vrot.slane %v680, 2
        %v682 = vadd.f32 %v680, %v681
        %v683 = vrot.slane %v682, 1
        %v684 = vadd.f32 %v682, %v683
        %v685 = vsel %vm290, %v647, 0.0
        %v686 = vrot.slane %v685, 4
        %v687 = vadd.f32 %v685, %v686
        %v688 = vrot.slane %v687, 2
        %v689 = vadd.f32 %v687, %v688
        %v690 = vrot.slane %v689, 1
        %v691 = vadd.f32 %v689, %v690
        %v692 = vsel %vm290, %v648, 0.0
        %v693 = vrot.slane %v692, 4
        %v694 = vadd.f32 %v692, %v693
        %v695 = vrot.slane %v694, 2
        %v696 = vadd.f32 %v694, %v695
        %v697 = vrot.slane %v696, 1
        %v698 = vadd.f32 %v696, %v697
        %v699 = vsel %vm290, %v649, 0.0
        %v700 = vrot.slane %v699, 4
        %v701 = vadd.f32 %v699, %v700
        %v702 = vrot.slane %v701, 2
        %v703 = vadd.f32 %v701, %v702
        %v704 = vrot.slane %v703, 1
        %v705 = vadd.f32 %v703, %v704
        %v714 = vsel %vm465, %v663, %v656
        %v715 = vsel %vm467, %v670, %v714
        %v716 = vsel %vm469, %v677, %v715
        %v717 = vsel %vm471, %v684, %v716
        %v718 = vsel %vm473, %v691, %v717
        %v719 = vsel %vm475, %v698, %v718
        %v720 = vsel %vm477, %v705, %v719
        %722 = vst.msk [vmem:[%s258] sm:$0xff] %vm290, %v720
        %s723 = sand.u32 %s164, 1
        %s724 = scalar_lea.sflag [#allocation3], %s723
        %s725 = sand.u32 %s164, 1
        %s726 = smul.addr %s725, 8
        %s727 = scalar_lea.vmem [#allocation2], %s726
        // Predicated region
        $region45: #{decoder_attention_forward.1} parent=43 // pred_check
          %p728 = pneg %p174
        $region46: #{decoder_attention_forward.1} parent=43 // pred_check_branch
          %730 = sbr.rel (%p728) target = $region48
        $region47: #{decoder_attention_forward.1} parent=43 // pred_region
          %732 = vsyncadd %s724, 0
          %s733 = smul.addr %s20, 8
          %s734 = scalar_lea.hbm %s6, %s733
          %s736 = sshll.u32 %s727, 4
          %s737 = int_to_ptr.vmem [resolvable:$true] %s736
          %s738 = sshll.u32 %s734, 4
          %s739 = int_to_ptr.hbm [resolvable:$true] %s738
          %741 = dma.vmem_to_hbm [thread:$0]  %s737, 128, %s739, %s724
        $region48: #{decoder_attention_forward.1} parent=43 // pred_fallthru
          _
      $region44: #{decoder_attention_forward.1} parent=5 // pred_fallthru
        _
      %p742 = scmp.le.s32.totalorder 2, %s15
      // Predicated region
      $region49: #{decoder_attention_forward.1} parent=5 // pred_check
        %p743 = pneg %p742
      $region50: #{decoder_attention_forward.1} parent=5 // pred_check_branch
        %745 = sbr.rel (%p743) target = $region52
      $region51: #{decoder_attention_forward.1} parent=5 // pred_region
        %s746 = ssub.s32 %s15, 2
        // Predicated region
        $region53: #{decoder_attention_forward.1} parent=51 // pred_check
          %p747 = pneg %p180
        $region54: #{decoder_attention_forward.1} parent=51 // pred_check_branch
          %749 = sbr.rel (%p747) target = $region56
        $region55: #{decoder_attention_forward.1} parent=51 // pred_region
          %s750 = sand.u32 %s165, 1
          %s751 = scalar_lea.sflag [#allocation3], %s750
          %s752 = sand.u32 %s165, 1
          %s753 = smul.addr %s752, 8
          %s754 = scalar_lea.vmem [#allocation2], %s753
          %756 = dma.done %s751, 128
        $region56: #{decoder_attention_forward.1} parent=51 // pred_fallthru
          _
      $region52: #{decoder_attention_forward.1} parent=5 // pred_fallthru
        _
    $region6: #{decoder_attention_forward.1} parent=1 // loop_footer
      %s19 = sadd.s32 1, %s15
    $region7: #{decoder_attention_forward.1} parent=1 // loop_footer_branch
      %14 = sbr.rel target = $region3
    $region8: #{decoder_attention_forward.1} parent=1 // loop_exit
      _
    %757 = vsyncpa [#allocation3], 1
    %s758 = scalar_lea.sflag [#allocation3], 1
    %759 = vsyncpa %s758, 1

</llo_original>
